<compile_context>
chip_gen: v6e
topology: v6e:2x2x1
jax: 0.10.0
libtpu: 0.0.40
codegen_flags: <defaults>
</compile_context>

<pallas_src>
import jax
import jax.numpy as jnp
from jax import lax
from jax.experimental import pallas as pl
from jax.experimental.pallas import tpu as pltpu
import numpy as np


def _reduction_kernel(dwp_ref, w_ref, b_ref, o_ref):
    """Single fused matmul: o = dwp @ W_comb + b_comb.

    dwp_ref : (tm, 9*Cin)        3x3/s2/p1 im2col patches (tap-major, ch-minor)
    w_ref   : (9*Cin, Cout_pad)  combined weight (depthwise*pointwise + proj)
    b_ref   : (1, Cout_pad)      combined bias
    o_ref   : (tm, Cout_pad)
    """
    o_ref[...] = (
        jnp.dot(dwp_ref[...], w_ref[...], preferred_element_type=jnp.float32)
        + b_ref[...]
    ).astype(o_ref.dtype)


def reduction_forward(x_nchw, params, *, tm=512):
    """Runs the Reduction forward pass. Input/output are NCHW (PyTorch layout)."""
    w_dw, b_dw, w_pw, b_pw, w_pr, b_pr = params
    x = jnp.transpose(x_nchw, (0, 2, 3, 1)).astype(jnp.float32)   # NHWC
    n, h, w, cin = x.shape
    ho, wo = h // 2, w // 2
    cout = w_pw.shape[1]
    m = n * ho * wo
    cout_pad = ((cout + 127) // 128) * 128                         # lane-dense output

    # --- Algebraic fusion: one combined weight / bias (tiny, done once) ---
    # per-tap:  diag(w_dw[k]) @ w_pw  ==  w_dw[k][:, None] * w_pw
    w_comb = (w_dw[:, :, None] * w_pw[None, :, :]).reshape(3, 3, cin, cout)
    # The 2x2/s2/p0 projection reads x[2*oh+ph, 2*ow+pw], which is exactly the
    # padded-3x3 tap (kh, kw) = (ph+1, pw+1); fold w_pr into those 4 taps.
    w_comb = w_comb.at[1:3, 1:3].add(w_pr)
    w_comb = w_comb.reshape(9 * cin, cout)
    b_comb = b_dw @ w_pw + b_pw + b_pr                             # (1, Cout)

    if cout_pad != cout:
        w_comb = jnp.pad(w_comb, ((0, 0), (0, cout_pad - cout)))
        b_comb = jnp.pad(b_comb, ((0, 0), (0, cout_pad - cout)))

    # --- glue: im2col patch extraction for the 3x3/s2/p1 window (plain JAX) ---
    xp = jnp.pad(x, ((0, 0), (1, 1), (1, 1), (0, 0)))
    taps = [xp[:, kh:kh + 2 * ho:2, kw:kw + 2 * wo:2, :]
            for kh in range(3) for kw in range(3)]
    dwp = jnp.stack(taps, axis=3).reshape(m, 9 * cin)              # (M, 9*Cin)

    # --- tiled, pipelined single-matmul pallas_call ---
    tm_eff = min(tm, m)
    grid = (pl.cdiv(m, tm_eff),)

    cost = pl.CostEstimate(
        flops=2 * m * 9 * cin * cout_pad,
        transcendentals=0,
        bytes_accessed=4 * (m * 9 * cin + m * cout_pad
                            + 9 * cin * cout_pad + cout_pad),
    )

    out_flat = pl.pallas_call(
        _reduction_kernel,
        out_shape=jax.ShapeDtypeStruct((m, cout_pad), jnp.float32),
        grid=grid,
        in_specs=[
            pl.BlockSpec((tm_eff, 9 * cin), lambda i: (i, 0)),      # patches (tiled over M)
            pl.BlockSpec((9 * cin, cout_pad), lambda i: (0, 0)),    # combined weight
            pl.BlockSpec((1, cout_pad), lambda i: (0, 0)),          # combined bias
        ],
        out_specs=pl.BlockSpec((tm_eff, cout_pad), lambda i: (i, 0)),
        compiler_params=pltpu.CompilerParams(
            dimension_semantics=("parallel",)),
        cost_estimate=cost,
    )(dwp, w_comb, b_comb)

    out = out_flat[:, :cout].reshape(n, ho, wo, cout).transpose(0, 3, 1, 2)
    return out


def reduction_reference(x_nchw, params):
    """Pure-JAX reference (lax conv) for correctness checking."""
    w_dw, b_dw, w_pw, b_pw, w_pr, b_pr = params
    x = jnp.transpose(x_nchw, (0, 2, 3, 1)).astype(jnp.float32)
    cin = x.shape[-1]
    cout = w_pw.shape[1]
    dn = ("NHWC", "HWIO", "NHWC")
    # depthwise 3x3 s2 p1
    k_dw = w_dw.reshape(3, 3, cin)[:, :, None, :]                  # (3,3,1,Cin)
    y = lax.conv_general_dilated(x, k_dw, (2, 2), [(1, 1), (1, 1)],
                                 dimension_numbers=dn,
                                 feature_group_count=cin) + b_dw.reshape(1, 1, 1, cin)
    # pointwise 1x1
    y = lax.conv_general_dilated(y, w_pw.reshape(1, 1, cin, cout), (1, 1), "VALID",
                                 dimension_numbers=dn) + b_pw.reshape(1, 1, 1, cout)
    # proj 2x2 s2 p0
    p = lax.conv_general_dilated(x, w_pr, (2, 2), "VALID",
                                 dimension_numbers=dn) + b_pr.reshape(1, 1, 1, cout)
    return jnp.transpose(y + p, (0, 3, 1, 2))


if __name__ == "__main__":
    N, CIN, COUT, H, W = 2, 4, 8, 16, 16

    key = jax.random.PRNGKey(0)
    kx, k1, k2, k3, k4, k5, k6 = jax.random.split(key, 7)

    x = jax.random.normal(kx, (N, CIN, H, W), dtype=jnp.float32)

    # Deterministic parameter init (shapes implied by the module's __init__).
    w_dw = 0.1 * jax.random.normal(k1, (9, CIN), dtype=jnp.float32)          # conv1 (depthwise 3x3)
    b_dw = 0.1 * jax.random.normal(k2, (1, CIN), dtype=jnp.float32)
    w_pw = 0.1 * jax.random.normal(k3, (CIN, COUT), dtype=jnp.float32)       # conv2 (1x1)
    b_pw = 0.1 * jax.random.normal(k4, (1, COUT), dtype=jnp.float32)
    w_pr = 0.1 * jax.random.normal(k5, (2, 2, CIN, COUT), dtype=jnp.float32) # proj (2x2 s2)
    b_pr = 0.1 * jax.random.normal(k6, (1, COUT), dtype=jnp.float32)
    params = (w_dw, b_dw, w_pw, b_pw, w_pr, b_pr)

    out = jax.block_until_ready(reduction_forward(x, params))
    ref = jax.block_until_ready(reduction_reference(x, params))

    assert out.shape == (N, COUT, H // 2, W // 2), out.shape
    np.testing.assert_allclose(np.asarray(out), np.asarray(ref), rtol=1e-4, atol=1e-4)

    print("KERNEL_OK")
</pallas_src>

<mosaic_0001>
module attributes {stable_mosaic.version = 11 : i64} {
  func.func @_reduction_kernel(%arg0: i32, %arg1: memref<128x36xf32, #tpu.memory_space<vmem>>, %arg2: memref<36x128xf32, #tpu.memory_space<vmem>>, %arg3: memref<1x128xf32, #tpu.memory_space<vmem>>, %arg4: memref<128x128xf32, #tpu.memory_space<vmem>>) attributes {dimension_semantics = [#tpu.dimension_semantics<parallel>], iteration_bounds = array<i64: 1>, scalar_prefetch = 0 : i64, scratch_operands = 0 : i64, tpu.core_type = #tpu.core_type<tc>, window_params = [{transform_indices = @transform_0, window_bounds = array<i64: 128, 36>}, {pipeline_mode = #tpu.pipeline_mode<synchronous>, transform_indices = @transform_1, window_bounds = array<i64: 36, 128>}, {pipeline_mode = #tpu.pipeline_mode<synchronous>, transform_indices = @transform_2, window_bounds = array<i64: 1, 128>}, {transform_indices = @transform_3, window_bounds = array<i64: 128, 128>}]} {
    %c0 = arith.constant 0 : index
    %c0_0 = arith.constant 0 : index
    %0 = vector.load %arg1[%c0, %c0_0] : memref<128x36xf32, #tpu.memory_space<vmem>>, vector<128x36xf32>
    %c0_1 = arith.constant 0 : index
    %c0_2 = arith.constant 0 : index
    %1 = vector.load %arg2[%c0_1, %c0_2] : memref<36x128xf32, #tpu.memory_space<vmem>>, vector<36x128xf32>
    %cst = arith.constant dense<0.000000e+00> : vector<128x128xf32>
    %2 = tpu.matmul %0, %1, %cst {dimension_numbers = #tpu.dot_dimension_numbers<[1], [0], [0], [1], [0, 0, 1, 1], [], []>} : vector<128x36xf32>, vector<36x128xf32>, vector<128x128xf32> -> vector<128x128xf32>
    %c0_3 = arith.constant 0 : index
    %c0_4 = arith.constant 0 : index
    %3 = vector.load %arg3[%c0_3, %c0_4] : memref<1x128xf32, #tpu.memory_space<vmem>>, vector<1x128xf32>
    %4 = vector.broadcast %3 : vector<1x128xf32> to vector<128x128xf32>
    %5 = arith.addf %2, %4 : vector<128x128xf32>
    %c0_5 = arith.constant 0 : index
    %c0_6 = arith.constant 0 : index
    %6 = vector.load %arg4[%c0_5, %c0_6] : memref<128x128xf32, #tpu.memory_space<vmem>>, vector<128x128xf32>
    tpu.vector_store %arg4[%c0_5, %c0_6], %5 {strides = array<i32>} : memref<128x128xf32, #tpu.memory_space<vmem>>, vector<128x128xf32>,
    return
  }
  func.func @transform_0(%arg0: i32) -> (i32, i32) {
    %c0_i32 = arith.constant 0 : i32
    %c0_i32_0 = arith.constant 0 : i32
    return %arg0, %c0_i32 : i32, i32
  }
  func.func @transform_1(%arg0: i32) -> (i32, i32) {
    %c0_i32 = arith.constant 0 : i32
    %c0_i32_0 = arith.constant 0 : i32
    %c0_i32_1 = arith.constant 0 : i32
    return %c0_i32, %c0_i32_0 : i32, i32
  }
  func.func @transform_2(%arg0: i32) -> (i32, i32) {
    %c0_i32 = arith.constant 0 : i32
    %c0_i32_0 = arith.constant 0 : i32
    %c0_i32_1 = arith.constant 0 : i32
    return %c0_i32, %c0_i32_0 : i32, i32
  }
  func.func @transform_3(%arg0: i32) -> (i32, i32) {
    %c0_i32 = arith.constant 0 : i32
    %c0_i32_0 = arith.constant 0 : i32
    return %arg0, %c0_i32 : i32, i32
  }
}

</mosaic_0001>

<llo_original>
// kernel: tpu_custom_call.1
$region0: #{tpu_custom_call.1}
  #allocation0 [shape = 'u32[]', space=smem, size = 0x4, offset = 0x4, fixed_abs, tag = 'smem constant byte address 0x4 - core index']
  #allocation1 [shape = 'u32[144,128]{1,0:T(1,128)}', space=vmem, size = 0x12000, scoped, tag = 'internal scratch']
  %s0 = inlined_call_operand.vmem [shape: f32[128,36], index: 0, kind: input, shape index: {}]
  %s1 = inlined_call_operand.vmem [shape: f32[36,128], index: 1, kind: input, shape index: {}]
  %s2 = inlined_call_operand.vmem [shape: f32[1,128], index: 2, kind: input, shape index: {}]
  %s3 = inlined_call_operand.hbm [shape: f32[128,128], index: 3, kind: output, shape index: {}]
  %s4 = sld [smem:[#allocation0]]
  $region22: #{tpu_custom_call.1} parent=0
    _
  %s6 = ssub.s32 1, %s4
  %s7 = scalar_select 0, %s6, %s4
  $region1: #{tpu_custom_call.1} parent=0
    #allocation2 [shape = 'u8[65536]{0}', space=vmem, size = 0x10000, scoped, tag = 'output window, operand 0, single buffered']
    #allocation3 [shape = 's32[1]{0}', space=sflag, size = 0x4, scoped, tag = 'scoped memory for tpu_custom_call.1']
    %8 = vsyncpa [#allocation3], 0
    // Predicated region
    $region2: #{tpu_custom_call.1} parent=1 // pred_check
      _
    $region3: #{tpu_custom_call.1} parent=1 // pred_check_branch
      %10 = sbr.rel (0) target = $region5
    $region4: #{tpu_custom_call.1} parent=1 // pred_region
      _
    $region5: #{tpu_custom_call.1} parent=1 // pred_fallthru
      _
    // Predicated region
    $region6: #{tpu_custom_call.1} parent=1 // pred_check
      _
    $region7: #{tpu_custom_call.1} parent=1 // pred_check_branch
      %12 = sbr.rel (0) target = $region9
    $region8: #{tpu_custom_call.1} parent=1 // pred_region
      _
    $region9: #{tpu_custom_call.1} parent=1 // pred_fallthru
      _
    // Predicated region
    $region10: #{tpu_custom_call.1} parent=1 // pred_check
      _
    $region11: #{tpu_custom_call.1} parent=1 // pred_check_branch
      %14 = sbr.rel (0) target = $region13
    $region12: #{tpu_custom_call.1} parent=1 // pred_region
      _
    $region13: #{tpu_custom_call.1} parent=1 // pred_fallthru
      _
    %v15 = vld [vmem:[%s0] sm:$0xff]
    %v16 = vld [vmem:[%s0 + $0x8] sm:$0xff]
    %v17 = vld [vmem:[%s0 + $0x10] sm:$0xff]
    %v18 = vld [vmem:[%s0 + $0x18] sm:$0xff]
    %v19 = vld [vmem:[%s0 + $0x20] sm:$0xff]
    %v20 = vld [vmem:[%s0 + $0x28] sm:$0xff]
    %v21 = vld [vmem:[%s0 + $0x30] sm:$0xff]
    %v22 = vld [vmem:[%s0 + $0x38] sm:$0xff]
    %v23 = vld [vmem:[%s0 + $0x40] sm:$0xff]
    %v24 = vld [vmem:[%s0 + $0x48] sm:$0xff]
    %v25 = vld [vmem:[%s0 + $0x50] sm:$0xff]
    %v26 = vld [vmem:[%s0 + $0x58] sm:$0xff]
    %v27 = vld [vmem:[%s0 + $0x60] sm:$0xff]
    %v28 = vld [vmem:[%s0 + $0x68] sm:$0xff]
    %v29 = vld [vmem:[%s0 + $0x70] sm:$0xff]
    %v30 = vld [vmem:[%s0 + $0x78] sm:$0xff]
    %v31 = vld [vmem:[%s1] sm:$0xff]
    %v32 = vld [vmem:[%s1 + $0x8] sm:$0xff]
    %v33 = vld [vmem:[%s1 + $0x10] sm:$0xff]
    %v34 = vld [vmem:[%s1 + $0x18] sm:$0xff]
    %v35 = vld [vmem:[%s1 + $0x20] sm:$0xf]
    %v36 = vld [vmem:[%s2] sm:$0x1]
    %v38 = vlaneseq
    %v39 = vshrl.u32 %v38, 7
    %v40 = vsub.s32 0, %v39
    %v41 = vrot.slane %v36, %v40
    %vm43 = vcmask 293888
    %v45 = vsel %vm43, %v15, 0
    %v48 = vsel %vm43, %v16, 0
    %v51 = vsel %vm43, %v17, 0
    %v54 = vsel %vm43, %v18, 0
    %v57 = vsel %vm43, %v19, 0
    %v60 = vsel %vm43, %v20, 0
    %v63 = vsel %vm43, %v21, 0
    %v66 = vsel %vm43, %v22, 0
    %v69 = vsel %vm43, %v23, 0
    %v72 = vsel %vm43, %v24, 0
    %v75 = vsel %vm43, %v25, 0
    %v78 = vsel %vm43, %v26, 0
    %v81 = vsel %vm43, %v27, 0
    %v84 = vsel %vm43, %v28, 0
    %v87 = vsel %vm43, %v29, 0
    %v90 = vsel %vm43, %v30, 0
    %vm92 = vcmask 1043456
    %v94 = vsel %vm92, %v35, 0
    %96 = vmatprep.subr.mxu0 0.0
    %97 = vmatpush1.msra.mxu0 0.0
    %98 = vmatprep.subr.mxu0 0.0
    %99 = vmatpush1.msra.mxu0 0.0
    %100 = vmatprep.subr.mxu0 0.0
    %101 = vmatpush1.msra.mxu0 0.0
    %102 = vmatprep.subr.mxu0 0.0
    %103 = vmatpush1.msra.mxu0 0.0
    %104 = vmatprep.subr.mxu0 0.0
    %105 = vmatpush1.msra.mxu0 0.0
    %106 = vmatprep.subr.mxu0 0.0
    %107 = vmatpush1.msra.mxu0 0.0
    %108 = vmatprep.subr.mxu0 0.0
    %109 = vmatpush1.msra.mxu0 0.0
    %110 = vmatprep.subr.mxu0 0.0
    %111 = vmatpush1.msra.mxu0 0.0
    %112 = vmatprep.subr.mxu0 0.0
    %113 = vmatpush1.msra.mxu0 0.0
    %114 = vmatprep.subr.mxu0 0.0
    %115 = vmatpush1.msra.mxu0 0.0
    %116 = vmatprep.subr.mxu0 0.0
    %117 = vmatpush1.msra.mxu0 0.0
    %118 = vmatprep.subr.mxu0 0.0
    %119 = vmatpush1.msra.mxu0 %v94
    %120 = vmatprep.subr.mxu0 0.0
    %121 = vmatpush1.msra.mxu0 %v34
    %122 = vmatprep.subr.mxu0 0.0
    %123 = vmatpush1.msra.mxu0 %v33
    %124 = vmatprep.subr.mxu0 0.0
    %125 = vmatpush1.msra.mxu0 %v32
    %126 = vmatprep.subr.mxu0 0.0
    %127 = vmatpush1.msra.mxu0 %v31
    %128 = vmatprep.subr.mxu0 0.0
    %129 = vmatpush2.msra.mxu0 0.0
    %130 = vmatprep.subr.mxu0 0.0
    %131 = vmatpush2.msra.mxu0 0.0
    %132 = vmatprep.subr.mxu0 0.0
    %133 = vmatpush2.msra.mxu0 0.0
    %134 = vmatprep.subr.mxu0 0.0
    %135 = vmatpush2.msra.mxu0 0.0
    %136 = vmatprep.subr.mxu0 0.0
    %137 = vmatpush2.msra.mxu0 0.0
    %138 = vmatprep.subr.mxu0 0.0
    %139 = vmatpush2.msra.mxu0 0.0
    %140 = vmatprep.subr.mxu0 0.0
    %141 = vmatpush2.msra.mxu0 0.0
    %142 = vmatprep.subr.mxu0 0.0
    %143 = vmatpush2.msra.mxu0 0.0
    %144 = vmatprep.subr.mxu0 0.0
    %145 = vmatpush2.msra.mxu0 0.0
    %146 = vmatprep.subr.mxu0 0.0
    %147 = vmatpush2.msra.mxu0 0.0
    %148 = vmatprep.subr.mxu0 0.0
    %149 = vmatpush2.msra.mxu0 0.0
    %150 = vmatprep.subr.mxu0 0.0
    %151 = vmatpush2.msra.mxu0 0.0
    %152 = vmatprep.subr.mxu0 0.0
    %153 = vmatpush2.msra.mxu0 0.0
    %154 = vmatprep.subr.mxu0 0.0
    %155 = vmatpush2.msra.mxu0 0.0
    %156 = vmatprep.subr.mxu0 0.0
    %157 = vmatpush2.msra.mxu0 0.0
    %158 = vmatprep.subr.mxu0 0.0
    %159 = vmatpush2.msra.mxu0 0.0
    %160 = vmatprep.mubr.f32.mxu0 0.0
    %161 = vmatmul.mubr.f32.gmra.mxu0 %v45
    %v162 = vpop.f32.mrf.mxu0
    %v163 = vadd.f32 %v41, %v162
    %v164 = vpop.f32.mrf.mxu0
    %165 = vmatprep.mubr.f32.mxu0 0.0
    %166 = vmatmul.mubr.f32.gmra.mxu0 %v48
    %v167 = vpop.f32.mrf.mxu0
    %v168 = vadd.f32 %v41, %v167
    %v169 = vpop.f32.mrf.mxu0
    %170 = vmatprep.mubr.f32.mxu0 0.0
    %171 = vmatmul.mubr.f32.gmra.mxu0 %v51
    %v172 = vpop.f32.mrf.mxu0
    %v173 = vadd.f32 %v41, %v172
    %v174 = vpop.f32.mrf.mxu0
    %175 = vmatprep.mubr.f32.mxu0 0.0
    %176 = vmatmul.mubr.f32.gmra.mxu0 %v54
    %v177 = vpop.f32.mrf.mxu0
    %v178 = vadd.f32 %v41, %v177
    %v179 = vpop.f32.mrf.mxu0
    %180 = vmatprep.mubr.f32.mxu0 0.0
    %181 = vmatmul.mubr.f32.gmra.mxu0 %v57
    %v182 = vpop.f32.mrf.mxu0
    %v183 = vadd.f32 %v41, %v182
    %v184 = vpop.f32.mrf.mxu0
    %185 = vmatprep.mubr.f32.mxu0 0.0
    %186 = vmatmul.mubr.f32.gmra.mxu0 %v60
    %v187 = vpop.f32.mrf.mxu0
    %v188 = vadd.f32 %v41, %v187
    %v189 = vpop.f32.mrf.mxu0
    %190 = vmatprep.mubr.f32.mxu0 0.0
    %191 = vmatmul.mubr.f32.gmra.mxu0 %v63
    %v192 = vpop.f32.mrf.mxu0
    %v193 = vadd.f32 %v41, %v192
    %v194 = vpop.f32.mrf.mxu0
    %195 = vmatprep.mubr.f32.mxu0 0.0
    %196 = vmatmul.mubr.f32.gmra.mxu0 %v66
    %v197 = vpop.f32.mrf.mxu0
    %v198 = vadd.f32 %v41, %v197
    %v199 = vpop.f32.mrf.mxu0
    %200 = vmatprep.mubr.f32.mxu0 0.0
    %201 = vmatmul.mubr.f32.gmra.mxu0 %v69
    %v202 = vpop.f32.mrf.mxu0
    %v203 = vadd.f32 %v41, %v202
    %v204 = vpop.f32.mrf.mxu0
    %205 = vmatprep.mubr.f32.mxu0 0.0
    %206 = vmatmul.mubr.f32.gmra.mxu0 %v72
    %v207 = vpop.f32.mrf.mxu0
    %v208 = vadd.f32 %v41, %v207
    %v209 = vpop.f32.mrf.mxu0
    %210 = vmatprep.mubr.f32.mxu0 0.0
    %211 = vmatmul.mubr.f32.gmra.mxu0 %v75
    %v212 = vpop.f32.mrf.mxu0
    %v213 = vadd.f32 %v41, %v212
    %v214 = vpop.f32.mrf.mxu0
    %215 = vmatprep.mubr.f32.mxu0 0.0
    %216 = vmatmul.mubr.f32.gmra.mxu0 %v78
    %v217 = vpop.f32.mrf.mxu0
    %v218 = vadd.f32 %v41, %v217
    %v219 = vpop.f32.mrf.mxu0
    %220 = vmatprep.mubr.f32.mxu0 0.0
    %221 = vmatmul.mubr.f32.gmra.mxu0 %v81
    %v222 = vpop.f32.mrf.mxu0
    %v223 = vadd.f32 %v41, %v222
    %v224 = vpop.f32.mrf.mxu0
    %225 = vmatprep.mubr.f32.mxu0 0.0
    %226 = vmatmul.mubr.f32.gmra.mxu0 %v84
    %v227 = vpop.f32.mrf.mxu0
    %v228 = vadd.f32 %v41, %v227
    %v229 = vpop.f32.mrf.mxu0
    %230 = vmatprep.mubr.f32.mxu0 0.0
    %231 = vmatmul.mubr.f32.gmra.mxu0 %v87
    %v232 = vpop.f32.mrf.mxu0
    %v233 = vadd.f32 %v41, %v232
    %v234 = vpop.f32.mrf.mxu0
    %235 = vmatprep.mubr.f32.mxu0 0.0
    %236 = vmatmul.mubr.f32.gmra.mxu0 %v90
    %v237 = vpop.f32.mrf.mxu0
    %v238 = vadd.f32 %v41, %v237
    %v239 = vpop.f32.mrf.mxu0
    %240 = vdwg.mxu0
    %241 = vst [vmem:[#allocation2] sm:$0xff] %v163
    %242 = vst [vmem:[#allocation2 + $0x8] sm:$0xff] %v168
    %243 = vst [vmem:[#allocation2 + $0x10] sm:$0xff] %v173
    %244 = vst [vmem:[#allocation2 + $0x18] sm:$0xff] %v178
    %245 = vst [vmem:[#allocation2 + $0x20] sm:$0xff] %v183
    %246 = vst [vmem:[#allocation2 + $0x28] sm:$0xff] %v188
    %247 = vst [vmem:[#allocation2 + $0x30] sm:$0xff] %v193
    %248 = vst [vmem:[#allocation2 + $0x38] sm:$0xff] %v198
    %249 = vst [vmem:[#allocation2 + $0x40] sm:$0xff] %v203
    %250 = vst [vmem:[#allocation2 + $0x48] sm:$0xff] %v208
    %251 = vst [vmem:[#allocation2 + $0x50] sm:$0xff] %v213
    %252 = vst [vmem:[#allocation2 + $0x58] sm:$0xff] %v218
    %253 = vst [vmem:[#allocation2 + $0x60] sm:$0xff] %v223
    %254 = vst [vmem:[#allocation2 + $0x68] sm:$0xff] %v228
    %255 = vst [vmem:[#allocation2 + $0x70] sm:$0xff] %v233
    %256 = vst [vmem:[#allocation2 + $0x78] sm:$0xff] %v238
    // Predicated region
    $region14: #{tpu_custom_call.1} parent=1 // pred_check
      _
    $region15: #{tpu_custom_call.1} parent=1 // pred_check_branch
      %258 = sbr.rel (0) target = $region17
    $region16: #{tpu_custom_call.1} parent=1 // pred_region
      %s260 = ssub.s32 2048, 2048
      %261 = vsyncadd [#allocation3], %s260
      %s262 = sshll.u32 [#allocation2], 4
      %s263 = int_to_ptr.vmem [resolvable:$true] %s262
      %268 = dma.vmem_to_hbm [thread:$0]  %s263, 2048, %s3, [#allocation3], 128, 128, 8
    $region17: #{tpu_custom_call.1} parent=1 // pred_fallthru
      _
    // Predicated region
    $region18: #{tpu_custom_call.1} parent=1 // pred_check
      _
    $region19: #{tpu_custom_call.1} parent=1 // pred_check_branch
      %270 = sbr.rel (0) target = $region21
    $region20: #{tpu_custom_call.1} parent=1 // pred_region
      %271 = dma.done [#allocation3], 2048
    $region21: #{tpu_custom_call.1} parent=1 // pred_fallthru
      _
    %272 = vsyncpa [#allocation3], 1

</llo_original>
